<compile_context>
chip_gen: v6e
topology: v6e:2x2x1
jax: 0.10.0
libtpu: 0.0.40
codegen_flags: <defaults>
</compile_context>

<pallas_src>
import jax
import jax.numpy as jnp
from jax import lax
from jax.experimental import pallas as pl
from jax.experimental.pallas import tpu as pltpu


# Double-buffered (input + output) block budget in bytes.  8 MiB stays inside
# v5e's 16 MiB scoped-VMEM default and leaves headroom on v7x (64 MiB physical)
# while still allowing very large lane-dense steps for tiny channel counts.
_VMEM_BLOCK_BUDGET = 8 * 1024 * 1024


# ---------------------------------------------------------------------------
# VPU path: tiny channel counts (Cin * Cout <= 64).
# ---------------------------------------------------------------------------
def _make_vpu_kernel(cin, cout, t_rows):
    """Channel mixing on dense (rows, 128) tiles, streamed in row chunks."""
    ch = min(t_rows, 32)              # 32 sublane-rows = 4 vregs per channel
    n_full = t_rows // ch
    rem = t_rows - n_full * ch

    def _chunk(w_ref, b_ref, x_ref, o_ref, r0, rows):
        # Load each input-channel chunk exactly once (lane + sublane dense).
        xs = [x_ref[0, ic, pl.ds(r0, rows), :].astype(jnp.float32)
              for ic in range(cin)]
        for oc in range(cout):
            # Bias folded into the first multiply-add.
            acc = xs[0] * w_ref[oc, 0] + b_ref[oc]
            for ic in range(1, cin):
                acc = acc + xs[ic] * w_ref[oc, ic]
            o_ref[0, oc, pl.ds(r0, rows), :] = acc.astype(o_ref.dtype)

    def kernel(w_ref, b_ref, x_ref, o_ref):
        # w_ref: (cout, cin) f32 SMEM   b_ref: (cout,) f32 SMEM
        # x_ref: (1, cin, t_rows, 128)  o_ref: (1, cout, t_rows, 128)
        def body(c, carry):
            r0 = pl.multiple_of(c * ch, ch)
            _chunk(w_ref, b_ref, x_ref, o_ref, r0, ch)
            return carry
        lax.fori_loop(0, n_full, body, 0, unroll=(n_full <= 8))
        if rem > 0:
            _chunk(w_ref, b_ref, x_ref, o_ref, n_full * ch, rem)

    return kernel


def _conv1x1_vpu(x, w2d, b1d, budget):
    N, cin, H, W = x.shape
    cout = w2d.shape[0]
    hw = H * W
    rows = pl.cdiv(hw, 128)
    hwp = rows * 128

    x3 = x.reshape(N, cin, hw)
    if hwp != hw:
        # TODO(synk): for tiny HW (7x7 / 14x14 stages) fold N into the lane
        # axis instead of zero-padding so lanes stay fully dense.
        x3 = jnp.pad(x3, ((0, 0), (0, 0), (0, hwp - hw)))
    x4 = x3.reshape(N, cin, rows, 128)

    itemsize = jnp.dtype(x.dtype).itemsize
    bytes_per_row = 2 * (cin + cout) * 128 * itemsize       # double-buffered
    cap_rows = max(8, min(1024, (budget // bytes_per_row) // 8 * 8))
    t_rows = rows if rows <= cap_rows else cap_rows
    n_blk = pl.cdiv(rows, t_rows)
    if N * n_blk < 2 and rows >= 16:
        # v7x has 2 TensorCores: give each one at least one program.
        t_rows = ((rows + 1) // 2 + 7) // 8 * 8
        n_blk = pl.cdiv(rows, t_rows)

    out4 = pl.pallas_call(
        _make_vpu_kernel(cin, cout, t_rows),
        out_shape=jax.ShapeDtypeStruct((N, cout, rows, 128), x.dtype),
        grid_spec=pltpu.PrefetchScalarGridSpec(
            num_scalar_prefetch=0,
            grid=(N, n_blk),
            in_specs=[
                pl.BlockSpec(memory_space=pltpu.MemorySpace.SMEM),   # weights
                pl.BlockSpec(memory_space=pltpu.MemorySpace.SMEM),   # bias
                pl.BlockSpec((1, cin, t_rows, 128), lambda n, j: (n, 0, j, 0)),
            ],
            out_specs=pl.BlockSpec((1, cout, t_rows, 128),
                                   lambda n, j: (n, 0, j, 0)),
        ),
        compiler_params=pltpu.CompilerParams(
            dimension_semantics=("parallel", "parallel")),
    )(w2d, b1d, x4)

    out3 = out4.reshape(N, cout, hwp)
    if hwp != hw:
        out3 = out3[:, :, :hw]
    return out3.reshape(N, cout, H, W)


# ---------------------------------------------------------------------------
# MXU path: real ResNet channel counts (Cin * Cout > 64).
# ---------------------------------------------------------------------------
def _mxu_kernel(w_ref, b_ref, x_ref, o_ref):
    # w_ref: (cout, cin) f32 VMEM (resident)   b_ref: (cout, 1) f32 VMEM
    # x_ref: (1, cin, t_hw)                    o_ref: (1, cout, t_hw)
    x = x_ref[0]
    acc = jnp.dot(w_ref[...].astype(x.dtype), x,
                  preferred_element_type=jnp.float32)
    o_ref[0] = (acc + b_ref[...]).astype(o_ref.dtype)


def _conv1x1_mxu(x, w2d, b1d, budget):
    N, cin, H, W = x.shape
    cout = w2d.shape[0]
    hw = H * W
    x3 = x.reshape(N, cin, hw)                            # free reshape

    itemsize = jnp.dtype(x.dtype).itemsize
    per_lane = 2 * (cin + cout) * itemsize                # double-buffered
    cap = max(128, min(16384, (budget // per_lane) // 128 * 128))
    t_hw = hw if hw <= cap else cap
    n_blk = pl.cdiv(hw, t_hw)
    if N * n_blk < 2 and hw >= 256:
        # v7x has 2 TensorCores: give each one at least one program.
        t_hw = min(t_hw, ((hw + 255) // 256) * 128)
        n_blk = pl.cdiv(hw, t_hw)

    out3 = pl.pallas_call(
        _mxu_kernel,
        out_shape=jax.ShapeDtypeStruct((N, cout, hw), x.dtype),
        grid_spec=pltpu.PrefetchScalarGridSpec(
            num_scalar_prefetch=0,
            grid=(N, n_blk),
            in_specs=[
                # Constant block index -> weights / bias stay resident in VMEM.
                pl.BlockSpec((cout, cin), lambda n, j: (0, 0)),
                pl.BlockSpec((cout, 1), lambda n, j: (0, 0)),
                pl.BlockSpec((1, cin, t_hw), lambda n, j: (n, 0, j)),
            ],
            out_specs=pl.BlockSpec((1, cout, t_hw), lambda n, j: (n, 0, j)),
        ),
        compiler_params=pltpu.CompilerParams(
            dimension_semantics=("parallel", "parallel")),
    )(w2d, b1d.reshape(cout, 1), x3)

    return out3.reshape(N, cout, H, W)


def conv1x1(x_nchw, weight, bias, *, vmem_block_budget=_VMEM_BLOCK_BUDGET):
    """nn.Conv2d(Cin, Cout, kernel_size=1) forward, NCHW in / NCHW out.

    weight: (Cout, Cin, 1, 1) PyTorch layout, bias: (Cout,).
    """
    _, cin, _, _ = x_nchw.shape
    cout = weight.shape[0]
    w2d = weight.reshape(cout, cin).astype(jnp.float32)
    b1d = bias.astype(jnp.float32)
    if cin * cout <= 64:
        return _conv1x1_vpu(x_nchw, w2d, b1d, vmem_block_budget)
    return _conv1x1_mxu(x_nchw, w2d, b1d, vmem_block_budget)


# ---------------------------------------------------------------------------
# Final classifier: fc = nn.Linear(512, 9)  (MyModel.fc), single MXU matmul.
# ---------------------------------------------------------------------------
def _linear_kernel(x_ref, wt_ref, b_ref, o_ref):
    acc = jnp.dot(x_ref[...].astype(jnp.float32), wt_ref[...],
                  preferred_element_type=jnp.float32)
    o_ref[...] = (acc + b_ref[...]).astype(o_ref.dtype)


def linear(x, weight, bias):
    """nn.Linear forward: x (N, K) @ weight.T + bias (weight: (M, K))."""
    N, _ = x.shape
    M = weight.shape[0]
    return pl.pallas_call(
        _linear_kernel,
        out_shape=jax.ShapeDtypeStruct((N, M), x.dtype),
        in_specs=[
            pl.BlockSpec(memory_space=pltpu.MemorySpace.VMEM),
            pl.BlockSpec(memory_space=pltpu.MemorySpace.VMEM),
            pl.BlockSpec(memory_space=pltpu.MemorySpace.VMEM),
        ],
        out_specs=pl.BlockSpec(memory_space=pltpu.MemorySpace.VMEM),
    )(x, weight.T.astype(jnp.float32), bias.reshape(1, M).astype(jnp.float32))


if __name__ == "__main__":
    key = jax.random.PRNGKey(0)
    ks = jax.random.split(key, 10)
    HI = lax.Precision.HIGHEST

    # 1) Tiny-channel 1x1 conv (VPU path), HW a multiple of 128.
    N, Cin, H, W, Cout = 2, 4, 16, 16, 3
    x = jax.random.normal(ks[0], (N, Cin, H, W), jnp.float32)
    w = jax.random.normal(ks[1], (Cout, Cin, 1, 1), jnp.float32) * 0.1
    b = jax.random.normal(ks[2], (Cout,), jnp.float32) * 0.1
    out = jax.block_until_ready(conv1x1(x, w, b))
    ref = (jnp.einsum("nchw,oc->nohw", x, w.reshape(Cout, Cin), precision=HI)
           + b[None, :, None, None])
    assert out.shape == (N, Cout, H, W)
    assert jnp.allclose(out, ref, atol=1e-4, rtol=1e-4)

    # 2) Tiny-channel, HW NOT a multiple of 128 (pad / tail correctness).
    x2 = jax.random.normal(ks[3], (N, Cin, 7, 7), jnp.float32)
    out2 = jax.block_until_ready(conv1x1(x2, w, b))
    ref2 = (jnp.einsum("nchw,oc->nohw", x2, w.reshape(Cout, Cin), precision=HI)
            + b[None, :, None, None])
    assert jnp.allclose(out2, ref2, atol=1e-4, rtol=1e-4)

    # 3) ResNet-like channel counts (MXU path), e.g. a downsample 1x1 conv.
    Cin3, Cout3 = 64, 128
    x3 = jax.random.normal(ks[4], (N, Cin3, 16, 16), jnp.float32)
    w3 = jax.random.normal(ks[5], (Cout3, Cin3, 1, 1), jnp.float32) * 0.05
    b3 = jax.random.normal(ks[6], (Cout3,), jnp.float32) * 0.05
    out3 = jax.block_until_ready(conv1x1(x3, w3, b3))
    ref3 = (jnp.einsum("nchw,oc->nohw", x3, w3.reshape(Cout3, Cin3),
                       precision=HI) + b3[None, :, None, None])
    assert jnp.allclose(out3, ref3, atol=2e-2, rtol=2e-2)

    # 4) Final classifier fc = nn.Linear(512, 9) on pooled features.
    feats = jax.random.normal(ks[7], (N, 512), jnp.float32)
    wf = jax.random.normal(ks[8], (9, 512), jnp.float32) * 0.02
    bf = jax.random.normal(ks[9], (9,), jnp.float32) * 0.02
    outf = jax.block_until_ready(linear(feats, wf, bf))
    reff = jnp.dot(feats, wf.T, precision=HI) + bf
    assert outf.shape == (N, 9)
    assert jnp.allclose(outf, reff, atol=2e-2, rtol=2e-2)

    print("KERNEL_OK")
</pallas_src>

<mosaic_0001>
module attributes {stable_mosaic.version = 11 : i64} {
  func.func @kernel(%arg0: i32, %arg1: i32, %arg2: memref<3x4xf32, #tpu.memory_space<smem>>, %arg3: memref<3xf32, #tpu.memory_space<smem>>, %arg4: memref<1x4x2x128xf32, #tpu.memory_space<vmem>>, %arg5: memref<1x3x2x128xf32, #tpu.memory_space<vmem>>) attributes {dimension_semantics = [#tpu.dimension_semantics<parallel>, #tpu.dimension_semantics<parallel>], iteration_bounds = array<i64: 2, 1>, scalar_prefetch = 0 : i64, scratch_operands = 0 : i64, tpu.core_type = #tpu.core_type<tc>, window_params = [{transform_indices = @transform_0, window_bounds = array<i64: 3, 4>}, {transform_indices = @transform_1, window_bounds = array<i64: 3>}, {transform_indices = @transform_2, window_bounds = array<i64: 1, 4, 2, 128>}, {transform_indices = @transform_3, window_bounds = array<i64: 1, 3, 2, 128>}]} {
    %c0_i32 = arith.constant 0 : i32
    %c2_i32 = arith.constant 2 : i32
    %0 = arith.muli %c0_i32, %c2_i32 : i32
    %1 = tpu.assume_multiple %0, 2 : i32
    %c0 = arith.constant 0 : index
    %c0_0 = arith.constant 0 : index
    %2 = arith.index_cast %1 : i32 to index
    %c0_1 = arith.constant 0 : index
    %3 = vector.load %arg4[%c0, %c0_0, %2, %c0_1] : memref<1x4x2x128xf32, #tpu.memory_space<vmem>>, vector<1x1x2x128xf32>
    %4 = vector.shape_cast %3 : vector<1x1x2x128xf32> to vector<2x128xf32>
    %c0_2 = arith.constant 0 : index
    %c1 = arith.constant 1 : index
    %5 = arith.index_cast %1 : i32 to index
    %c0_3 = arith.constant 0 : index
    %6 = vector.load %arg4[%c0_2, %c1, %5, %c0_3] : memref<1x4x2x128xf32, #tpu.memory_space<vmem>>, vector<1x1x2x128xf32>
    %7 = vector.shape_cast %6 : vector<1x1x2x128xf32> to vector<2x128xf32>
    %c0_4 = arith.constant 0 : index
    %c2 = arith.constant 2 : index
    %8 = arith.index_cast %1 : i32 to index
    %c0_5 = arith.constant 0 : index
    %9 = vector.load %arg4[%c0_4, %c2, %8, %c0_5] : memref<1x4x2x128xf32, #tpu.memory_space<vmem>>, vector<1x1x2x128xf32>
    %10 = vector.shape_cast %9 : vector<1x1x2x128xf32> to vector<2x128xf32>
    %c0_6 = arith.constant 0 : index
    %c3 = arith.constant 3 : index
    %11 = arith.index_cast %1 : i32 to index
    %c0_7 = arith.constant 0 : index
    %12 = vector.load %arg4[%c0_6, %c3, %11, %c0_7] : memref<1x4x2x128xf32, #tpu.memory_space<vmem>>, vector<1x1x2x128xf32>
    %13 = vector.shape_cast %12 : vector<1x1x2x128xf32> to vector<2x128xf32>
    %c0_8 = arith.constant 0 : index
    %c0_9 = arith.constant 0 : index
    %14 = memref.load %arg2[%c0_8, %c0_9] : memref<3x4xf32, #tpu.memory_space<smem>>
    %15 = vector.broadcast %14 : f32 to vector<2x128xf32>
    %16 = arith.mulf %4, %15 : vector<2x128xf32>
    %c0_10 = arith.constant 0 : index
    %17 = memref.load %arg3[%c0_10] : memref<3xf32, #tpu.memory_space<smem>>
    %18 = vector.broadcast %17 : f32 to vector<2x128xf32>
    %19 = arith.addf %16, %18 : vector<2x128xf32>
    %c0_11 = arith.constant 0 : index
    %c1_12 = arith.constant 1 : index
    %20 = memref.load %arg2[%c0_11, %c1_12] : memref<3x4xf32, #tpu.memory_space<smem>>
    %21 = vector.broadcast %20 : f32 to vector<2x128xf32>
    %22 = arith.mulf %7, %21 : vector<2x128xf32>
    %23 = arith.addf %19, %22 : vector<2x128xf32>
    %c0_13 = arith.constant 0 : index
    %c2_14 = arith.constant 2 : index
    %24 = memref.load %arg2[%c0_13, %c2_14] : memref<3x4xf32, #tpu.memory_space<smem>>
    %25 = vector.broadcast %24 : f32 to vector<2x128xf32>
    %26 = arith.mulf %10, %25 : vector<2x128xf32>
    %27 = arith.addf %23, %26 : vector<2x128xf32>
    %c0_15 = arith.constant 0 : index
    %c3_16 = arith.constant 3 : index
    %28 = memref.load %arg2[%c0_15, %c3_16] : memref<3x4xf32, #tpu.memory_space<smem>>
    %29 = vector.broadcast %28 : f32 to vector<2x128xf32>
    %30 = arith.mulf %13, %29 : vector<2x128xf32>
    %31 = arith.addf %27, %30 : vector<2x128xf32>
    %c0_17 = arith.constant 0 : index
    %c0_18 = arith.constant 0 : index
    %32 = arith.index_cast %1 : i32 to index
    %c0_19 = arith.constant 0 : index
    %33 = vector.load %arg5[%c0_17, %c0_18, %32, %c0_19] : memref<1x3x2x128xf32, #tpu.memory_space<vmem>>, vector<1x1x2x128xf32>
    %34 = vector.shape_cast %33 : vector<1x1x2x128xf32> to vector<2x128xf32>
    %35 = vector.shape_cast %31 : vector<2x128xf32> to vector<1x1x2x128xf32>
    tpu.vector_store %arg5[%c0_17, %c0_18, %32, %c0_19], %35 {strides = array<i32>} : memref<1x3x2x128xf32, #tpu.memory_space<vmem>>, vector<1x1x2x128xf32>,
    %c1_20 = arith.constant 1 : index
    %c0_21 = arith.constant 0 : index
    %36 = memref.load %arg2[%c1_20, %c0_21] : memref<3x4xf32, #tpu.memory_space<smem>>
    %37 = vector.broadcast %36 : f32 to vector<2x128xf32>
    %38 = arith.mulf %4, %37 : vector<2x128xf32>
    %c1_22 = arith.constant 1 : index
    %39 = memref.load %arg3[%c1_22] : memref<3xf32, #tpu.memory_space<smem>>
    %40 = vector.broadcast %39 : f32 to vector<2x128xf32>
    %41 = arith.addf %38, %40 : vector<2x128xf32>
    %c1_23 = arith.constant 1 : index
    %c1_24 = arith.constant 1 : index
    %42 = memref.load %arg2[%c1_23, %c1_24] : memref<3x4xf32, #tpu.memory_space<smem>>
    %43 = vector.broadcast %42 : f32 to vector<2x128xf32>
    %44 = arith.mulf %7, %43 : vector<2x128xf32>
    %45 = arith.addf %41, %44 : vector<2x128xf32>
    %c1_25 = arith.constant 1 : index
    %c2_26 = arith.constant 2 : index
    %46 = memref.load %arg2[%c1_25, %c2_26] : memref<3x4xf32, #tpu.memory_space<smem>>
    %47 = vector.broadcast %46 : f32 to vector<2x128xf32>
    %48 = arith.mulf %10, %47 : vector<2x128xf32>
    %49 = arith.addf %45, %48 : vector<2x128xf32>
    %c1_27 = arith.constant 1 : index
    %c3_28 = arith.constant 3 : index
    %50 = memref.load %arg2[%c1_27, %c3_28] : memref<3x4xf32, #tpu.memory_space<smem>>
    %51 = vector.broadcast %50 : f32 to vector<2x128xf32>
    %52 = arith.mulf %13, %51 : vector<2x128xf32>
    %53 = arith.addf %49, %52 : vector<2x128xf32>
    %c0_29 = arith.constant 0 : index
    %c1_30 = arith.constant 1 : index
    %54 = arith.index_cast %1 : i32 to index
    %c0_31 = arith.constant 0 : index
    %55 = vector.load %arg5[%c0_29, %c1_30, %54, %c0_31] : memref<1x3x2x128xf32, #tpu.memory_space<vmem>>, vector<1x1x2x128xf32>
    %56 = vector.shape_cast %55 : vector<1x1x2x128xf32> to vector<2x128xf32>
    %57 = vector.shape_cast %53 : vector<2x128xf32> to vector<1x1x2x128xf32>
    tpu.vector_store %arg5[%c0_29, %c1_30, %54, %c0_31], %57 {strides = array<i32>} : memref<1x3x2x128xf32, #tpu.memory_space<vmem>>, vector<1x1x2x128xf32>,
    %c2_32 = arith.constant 2 : index
    %c0_33 = arith.constant 0 : index
    %58 = memref.load %arg2[%c2_32, %c0_33] : memref<3x4xf32, #tpu.memory_space<smem>>
    %59 = vector.broadcast %58 : f32 to vector<2x128xf32>
    %60 = arith.mulf %4, %59 : vector<2x128xf32>
    %c2_34 = arith.constant 2 : index
    %61 = memref.load %arg3[%c2_34] : memref<3xf32, #tpu.memory_space<smem>>
    %62 = vector.broadcast %61 : f32 to vector<2x128xf32>
    %63 = arith.addf %60, %62 : vector<2x128xf32>
    %c2_35 = arith.constant 2 : index
    %c1_36 = arith.constant 1 : index
    %64 = memref.load %arg2[%c2_35, %c1_36] : memref<3x4xf32, #tpu.memory_space<smem>>
    %65 = vector.broadcast %64 : f32 to vector<2x128xf32>
    %66 = arith.mulf %7, %65 : vector<2x128xf32>
    %67 = arith.addf %63, %66 : vector<2x128xf32>
    %c2_37 = arith.constant 2 : index
    %c2_38 = arith.constant 2 : index
    %68 = memref.load %arg2[%c2_37, %c2_38] : memref<3x4xf32, #tpu.memory_space<smem>>
    %69 = vector.broadcast %68 : f32 to vector<2x128xf32>
    %70 = arith.mulf %10, %69 : vector<2x128xf32>
    %71 = arith.addf %67, %70 : vector<2x128xf32>
    %c2_39 = arith.constant 2 : index
    %c3_40 = arith.constant 3 : index
    %72 = memref.load %arg2[%c2_39, %c3_40] : memref<3x4xf32, #tpu.memory_space<smem>>
    %73 = vector.broadcast %72 : f32 to vector<2x128xf32>
    %74 = arith.mulf %13, %73 : vector<2x128xf32>
    %75 = arith.addf %71, %74 : vector<2x128xf32>
    %c0_41 = arith.constant 0 : index
    %c2_42 = arith.constant 2 : index
    %76 = arith.index_cast %1 : i32 to index
    %c0_43 = arith.constant 0 : index
    %77 = vector.load %arg5[%c0_41, %c2_42, %76, %c0_43] : memref<1x3x2x128xf32, #tpu.memory_space<vmem>>, vector<1x1x2x128xf32>
    %78 = vector.shape_cast %77 : vector<1x1x2x128xf32> to vector<2x128xf32>
    %79 = vector.shape_cast %75 : vector<2x128xf32> to vector<1x1x2x128xf32>
    tpu.vector_store %arg5[%c0_41, %c2_42, %76, %c0_43], %79 {strides = array<i32>} : memref<1x3x2x128xf32, #tpu.memory_space<vmem>>, vector<1x1x2x128xf32>,
    %c1_i32 = arith.constant 1 : i32
    return
  }
  func.func @transform_0(%arg0: i32, %arg1: i32) -> (i32, i32) {
    %c0_i32 = arith.constant 0 : i32
    %c0_i32_0 = arith.constant 0 : i32
    %c0_i32_1 = arith.constant 0 : i32
    return %c0_i32, %c0_i32_0 : i32, i32
  }
  func.func @transform_1(%arg0: i32, %arg1: i32) -> i32 {
    %c0_i32 = arith.constant 0 : i32
    %c0_i32_0 = arith.constant 0 : i32
    return %c0_i32 : i32
  }
  func.func @transform_2(%arg0: i32, %arg1: i32) -> (i32, i32, i32, i32) {
    %c0_i32 = arith.constant 0 : i32
    %c0_i32_0 = arith.constant 0 : i32
    %c0_i32_1 = arith.constant 0 : i32
    return %arg0, %c0_i32, %arg1, %c0_i32_0 : i32, i32, i32, i32
  }
  func.func @transform_3(%arg0: i32, %arg1: i32) -> (i32, i32, i32, i32) {
    %c0_i32 = arith.constant 0 : i32
    %c0_i32_0 = arith.constant 0 : i32
    %c0_i32_1 = arith.constant 0 : i32
    return %arg0, %c0_i32, %arg1, %c0_i32_0 : i32, i32, i32, i32
  }
}

</mosaic_0001>

<llo_original>
// kernel: tpu_custom_call.1
$region0: #{tpu_custom_call.1}
  #allocation0 [shape = 'u32[]', space=smem, size = 0x4, offset = 0x4, fixed_abs, tag = 'smem constant byte address 0x4 - core index']
  #allocation1 [shape = 'u32[144,128]{1,0:T(1,128)}', space=vmem, size = 0x12000, scoped, tag = 'internal scratch']
  %s0 = inlined_call_operand.hbm [shape: f32[3,4], index: 0, kind: input, shape index: {}]
  %s1 = inlined_call_operand.vmem [shape: f32[3], index: 1, kind: input, shape index: {}]
  %s2 = inlined_call_operand.hbm [shape: f32[2,4,2,128], index: 2, kind: input, shape index: {}]
  %s3 = inlined_call_operand.hbm [shape: f32[2,3,2,128], index: 3, kind: output, shape index: {}]
  %s4 = sld [smem:[#allocation0]]
  $region57: #{tpu_custom_call.1} parent=0
    _
  %s6 = ssub.s32 1, %s4
  %s7 = scalar_select 0, %s6, %s4
  $region1: #{tpu_custom_call.1} parent=0
    #allocation2 [shape = 'u8[2048]{0}', space=smem, size = 0x800, scoped, tag = 'input window, operand 0, single buffered']
    #allocation3 [shape = 's32[2]{0}', space=sflag, size = 0x8, scoped, tag = 'scoped memory for tpu_custom_call.1']
    #allocation4 [shape = 's32[2]{0}', space=sflag, size = 0x8, scoped, tag = 'scoped memory for tpu_custom_call.1']
    #allocation5 [shape = 's32[2]{0}', space=sflag, size = 0x8, scoped, tag = 'scoped memory for tpu_custom_call.1']
    #allocation6 [shape = 's32[2]{0}', space=sflag, size = 0x8, scoped, tag = 'scoped memory for tpu_custom_call.1']
    #allocation7 [shape = 'u8[512]{0}', space=smem, size = 0x200, scoped, tag = 'input window, operand 1, single buffered']
    #allocation8 [shape = 'u8[8192]{0}', space=vmem, size = 0x2000, scoped, tag = 'input window, operand 2']
    #allocation9 [shape = 'u8[6144]{0}', space=vmem, size = 0x1800, scoped, tag = 'output window, operand 0']
    %8 = vsyncpa [#allocation5], 0
    %9 = vsyncpa [#allocation6], 0
    %10 = vsyncpa [#allocation3], 0
    %s11 = scalar_lea.sflag [#allocation3], 1
    %12 = vsyncpa %s11, 0
    %13 = vsyncpa [#allocation4], 0
    %s14 = scalar_lea.sflag [#allocation4], 1
    %15 = vsyncpa %s14, 0
    loop: start=0, step=1, limit=4
    $region2: #{tpu_custom_call.1} parent=1 // loop_pre_header
      _
    $region3: #{tpu_custom_call.1} parent=1 // loop_header
      %s17 = sphi 0, %s21
      %p18 = scmp.ge.s32.totalorder %s17, 4
      %s24 = sphi 0, %s36
      %s25 = sphi 0, %s32
      %s26 = sphi 0, %s24
      %s27 = sphi 0, %s25
      %s28 = sphi 0, %s26
      %s29 = sphi 0, %s27
      %s37 = sphi 0, %s37
      %s39 = sphi 0, %s37
      %s40 = sphi 0, %s39
      %s54 = sphi 0, %s40
      %s58 = sphi 0, %s58
      %s60 = sphi 0, %s58
      %s61 = sphi 0, %s60
      %s75 = sphi 0, %s61
      %s83 = sphi 0, %s85
      %s86 = sphi 0, %s83
      %s87 = sphi 0, %s86
      %s103 = sphi 0, %s87
      %s111 = sphi 0, %s113
      %s114 = sphi 0, %s111
      %s115 = sphi 0, %s114
      %s131 = sphi 0, %s115
    $region4: #{tpu_custom_call.1} parent=1 // loop_header_branch
      %20 = sbr.rel (%p18) target = $region8
    $region5: #{tpu_custom_call.1} parent=1 // loop_body
      %s22 = ssub.s32 %s17, 1
      %s23 = ssub.s32 %s17, 2
      %s30 = sadd.s32 1, %s25
      %p31 = scmp.ge.s32.totalorder %s30, 1
      %s32 = scalar_select %p31, 0, %s30
      %s33 = sadd.s32 1, %s24
      %s34 = scalar_select %p31, %s33, %s24
      %p35 = scmp.ge.s32.totalorder %s34, 2
      %s36 = scalar_select %p35, 0, %s34
      %s38 = sadd.s32 %s37, 1
      %p41 = scmp.eq.s32.totalorder %s17, 1
      %p42 = scmp.ne.s32.totalorder %s37, %s39
      %p43 = scmp.eq.s32.totalorder %s17, 0
      %p44 = por %p42, %p43
      %p45 = scmp.ne.s32.totalorder %s37, %s39
      %p46 = scmp.eq.s32.totalorder %s22, 1
      %p47 = por %p45, %p46
      %p48 = scmp.ne.s32.totalorder %s39, %s40
      %p49 = scmp.eq.s32.totalorder %s22, 0
      %p50 = por %p48, %p49
      %p51 = scmp.ne.s32.totalorder %s39, %s40
      %p52 = scmp.eq.s32.totalorder %s23, 1
      %p53 = por %p51, %p52
      %p55 = scmp.ne.s32.totalorder %s40, %s54
      %p56 = scmp.eq.s32.totalorder %s23, 0
      %p57 = por %p55, %p56
      %s59 = sadd.s32 %s58, 1
      %p62 = scmp.eq.s32.totalorder %s17, 1
      %p63 = scmp.ne.s32.totalorder %s58, %s60
      %p64 = scmp.eq.s32.totalorder %s17, 0
      %p65 = por %p63, %p64
      %p66 = scmp.ne.s32.totalorder %s58, %s60
      %p67 = scmp.eq.s32.totalorder %s22, 1
      %p68 = por %p66, %p67
      %p69 = scmp.ne.s32.totalorder %s60, %s61
      %p70 = scmp.eq.s32.totalorder %s22, 0
      %p71 = por %p69, %p70
      %p72 = scmp.ne.s32.totalorder %s60, %s61
      %p73 = scmp.eq.s32.totalorder %s23, 1
      %p74 = por %p72, %p73
      %p76 = scmp.ne.s32.totalorder %s61, %s75
      %p77 = scmp.eq.s32.totalorder %s23, 0
      %p78 = por %p76, %p77
      %s79 = ssub.s32 %s24, %s36
      %s80 = ssub.s32 %s25, %s32
      %s81 = sor.u32 %s79, %s80
      %p82 = scmp.eq.s32.totalorder %s81, 0
      %s84 = sadd.s32 %s83, 1
      %s85 = scalar_select %p82, %s83, %s84
      %p88 = pneg %p82
      %p89 = scmp.eq.s32.totalorder %s17, 1
      %p90 = por %p88, %p89
      %p91 = scmp.ne.s32.totalorder %s83, %s86
      %p92 = scmp.eq.s32.totalorder %s17, 0
      %p93 = por %p91, %p92
      %p94 = scmp.ne.s32.totalorder %s83, %s86
      %p95 = scmp.eq.s32.totalorder %s22, 1
      %p96 = por %p94, %p95
      %p97 = scmp.ne.s32.totalorder %s86, %s87
      %p98 = scmp.eq.s32.totalorder %s22, 0
      %p99 = por %p97, %p98
      %p100 = scmp.ne.s32.totalorder %s86, %s87
      %p101 = scmp.eq.s32.totalorder %s23, 1
      %p102 = por %p100, %p101
      %p104 = scmp.ne.s32.totalorder %s87, %s103
      %p105 = scmp.eq.s32.totalorder %s23, 0
      %p106 = por %p104, %p105
      %s107 = ssub.s32 %s24, %s36
      %s108 = ssub.s32 %s25, %s32
      %s109 = sor.u32 %s107, %s108
      %p110 = scmp.eq.s32.totalorder %s109, 0
      %s112 = sadd.s32 %s111, 1
      %s113 = scalar_select %p110, %s111, %s112
      %p116 = pneg %p110
      %p117 = scmp.eq.s32.totalorder %s17, 1
      %p118 = por %p116, %p117
      %p119 = scmp.ne.s32.totalorder %s111, %s114
      %p120 = scmp.eq.s32.totalorder %s17, 0
      %p121 = por %p119, %p120
      %p122 = scmp.ne.s32.totalorder %s111, %s114
      %p123 = scmp.eq.s32.totalorder %s22, 1
      %p124 = por %p122, %p123
      %p125 = scmp.ne.s32.totalorder %s114, %s115
      %p126 = scmp.eq.s32.totalorder %s22, 0
      %p127 = por %p125, %p126
      %p128 = scmp.ne.s32.totalorder %s114, %s115
      %p129 = scmp.eq.s32.totalorder %s23, 1
      %p130 = por %p128, %p129
      %p132 = scmp.ne.s32.totalorder %s115, %s131
      %p133 = scmp.eq.s32.totalorder %s23, 0
      %p134 = por %p132, %p133
      %p135 = scmp.le.s32.totalorder 1, %s17
      %p136 = scmp.lt.s32.totalorder %s17, 3
      %p137 = pnand %p135, %p136
      %p138 = pneg %p137
      // Predicated region
      $region9: #{tpu_custom_call.1} parent=5 // pred_check
        _
      $region10: #{tpu_custom_call.1} parent=5 // pred_check_branch
        %140 = sbr.rel (%p137) target = $region12
      $region11: #{tpu_custom_call.1} parent=5 // pred_region
        %s141 = ssub.s32 %s17, 1
        // Predicated region
        $region13: #{tpu_custom_call.1} parent=11 // pred_check
          %p142 = pneg %p50
        $region14: #{tpu_custom_call.1} parent=11 // pred_check_branch
          %144 = sbr.rel (%p142) target = $region16
        $region15: #{tpu_custom_call.1} parent=11 // pred_region
          %s146 = ssub.s32 64, 64
          %147 = vsyncadd [#allocation5], %s146
          %150 = dma.hbm_to_smem %s0, 64, [#allocation2], [#allocation5]
        $region16: #{tpu_custom_call.1} parent=11 // pred_fallthru
          _
        // Predicated region
        $region17: #{tpu_custom_call.1} parent=11 // pred_check
          %p151 = pneg %p71
        $region18: #{tpu_custom_call.1} parent=11 // pred_check_branch
          %153 = sbr.rel (%p151) target = $region20
        $region19: #{tpu_custom_call.1} parent=11 // pred_region
          %s155 = ssub.s32 16, 16
          %156 = vsyncadd [#allocation6], %s155
          %s158 = sshll.u32 %s1, 4
          %s159 = int_to_ptr.vmem [resolvable:$true] %s158
          %161 = dma.vmem_to_smem %s159, 16, [#allocation7], [#allocation6]
        $region20: #{tpu_custom_call.1} parent=11 // pred_fallthru
          _
      $region12: #{tpu_custom_call.1} parent=5 // pred_fallthru
        _
      %p162 = scmp.lt.s32.totalorder %s17, 2
      // Predicated region
      $region21: #{tpu_custom_call.1} parent=5 // pred_check
        %p163 = pneg %p162
      $region22: #{tpu_custom_call.1} parent=5 // pred_check_branch
        %165 = sbr.rel (%p163) target = $region24
      $region23: #{tpu_custom_call.1} parent=5 // pred_region
        // Predicated region
        $region25: #{tpu_custom_call.1} parent=23 // pred_check
          %p166 = pneg %p93
        $region26: #{tpu_custom_call.1} parent=23 // pred_check_branch
          %168 = sbr.rel (%p166) target = $region28
        $region27: #{tpu_custom_call.1} parent=23 // pred_region
          %s169 = sand.u32 %s83, 1
          %s170 = scalar_lea.sflag [#allocation3], %s169
          %s171 = sand.u32 %s83, 1
          %s172 = smul.addr %s171, 8
          %s173 = scalar_lea.vmem [#allocation8], %s172
          %s175 = ssub.s32 128, 128
          %176 = vsyncadd %s170, %s175
          %s177 = smul.addr %s24, 4
          %s178 = sadd.s32 %s25, %s177
          %s179 = smul.addr %s178, 32
          %s180 = scalar_lea.hbm %s2, %s179
          %s181 = sshll.u32 %s173, 4
          %s182 = int_to_ptr.vmem [resolvable:$true] %s181
          %187 = dma.hbm_to_vmem [thread:$0]  %s180, 128, %s182, %s170, 32, 32, 2
        $region28: #{tpu_custom_call.1} parent=23 // pred_fallthru
          _
      $region24: #{tpu_custom_call.1} parent=5 // pred_fallthru
        _
      %p188 = scmp.le.s32.totalorder 1, %s17
      %p189 = scmp.lt.s32.totalorder %s17, 3
      %p190 = pnand %p188, %p189
      %p191 = pneg %p190
      // Predicated region
      $region29: #{tpu_custom_call.1} parent=5 // pred_check
        _
      $region30: #{tpu_custom_call.1} parent=5 // pred_check_branch
        %193 = sbr.rel (%p190) target = $region32
      $region31: #{tpu_custom_call.1} parent=5 // pred_region
        %s194 = ssub.s32 %s17, 1
        // Predicated region
        $region33: #{tpu_custom_call.1} parent=31 // pred_check
          %p195 = pneg %p50
        $region34: #{tpu_custom_call.1} parent=31 // pred_check_branch
          %197 = sbr.rel (%p195) target = $region36
        $region35: #{tpu_custom_call.1} parent=31 // pred_region
          %198 = dma.done [#allocation5], 64
        $region36: #{tpu_custom_call.1} parent=31 // pred_fallthru
          _
        // Predicated region
        $region37: #{tpu_custom_call.1} parent=31 // pred_check
          %p199 = pneg %p71
        $region38: #{tpu_custom_call.1} parent=31 // pred_check_branch
          %201 = sbr.rel (%p199) target = $region40
        $region39: #{tpu_custom_call.1} parent=31 // pred_region
          %202 = dma.done [#allocation6], 16
        $region40: #{tpu_custom_call.1} parent=31 // pred_fallthru
          _
        %s203 = sand.u32 %s86, 1
        %s204 = scalar_lea.sflag [#allocation3], %s203
        %s205 = sand.u32 %s86, 1
        %s206 = smul.addr %s205, 8
        %s207 = scalar_lea.vmem [#allocation8], %s206
        // Predicated region
        $region41: #{tpu_custom_call.1} parent=31 // pred_check
          %p208 = pneg %p99
        $region42: #{tpu_custom_call.1} parent=31 // pred_check_branch
          %210 = sbr.rel (%p208) target = $region44
        $region43: #{tpu_custom_call.1} parent=31 // pred_region
          %211 = dma.done %s204, 128
        $region44: #{tpu_custom_call.1} parent=31 // pred_fallthru
          _
        %212 = sfence
        %p213 = pneg %p50
        %p214 = pneg %p47
        %p215 = pneg %p71
        %p216 = pneg %p68
        %s217 = sand.u32 %s86, 1
        %s218 = scalar_lea.sflag [#allocation3], %s217
        %s219 = sand.u32 %s86, 1
        %s220 = smul.addr %s219, 8
        %s221 = scalar_lea.vmem [#allocation8], %s220
        %p222 = pneg %p99
        %p223 = pneg %p96
        %p224 = pneg %p127
        %p225 = pneg %p124
        %s226 = sand.u32 %s114, 1
        %s227 = scalar_lea.sflag [#allocation4], %s226
        %s228 = sand.u32 %s114, 1
        %s229 = smul.addr %s228, 6
        %s230 = scalar_lea.vmem [#allocation9], %s229
        %v231 = vld [vmem:[%s207] sm:$0x3]
        %s232 = sadd.s32 0, 2
        %s233 = scalar_lea.vmem %s207, %s232 [#allocation8]
        %v234 = vld [vmem:[%s233] sm:$0x3]
        %s235 = sadd.s32 0, 4
        %s236 = scalar_lea.vmem %s207, %s235 [#allocation8]
        %v237 = vld [vmem:[%s236] sm:$0x3]
        %s238 = sadd.s32 0, 6
        %s239 = scalar_lea.vmem %s207, %s238 [#allocation8]
        %v240 = vld [vmem:[%s239] sm:$0x3]
        %s241 = sld [smem:[#allocation2]]
        %v242 = vstv %s241
        %v243 = vmul.f32 %v231, %v242
        %s244 = sld [smem:[#allocation7]]
        %v245 = vstv %s244
        %v246 = vadd.f32 %v243, %v245
        %s247 = sld [smem:[#allocation2 + $0x1]]
        %v248 = vstv %s247
        %v249 = vmul.f32 %v234, %v248
        %v250 = vadd.f32 %v246, %v249
        %s251 = sld [smem:[#allocation2 + $0x2]]
        %v252 = vstv %s251
        %v253 = vmul.f32 %v237, %v252
        %v254 = vadd.f32 %v250, %v253
        %s255 = sld [smem:[#allocation2 + $0x3]]
        %v256 = vstv %s255
        %v257 = vmul.f32 %v240, %v256
        %v258 = vadd.f32 %v254, %v257
        %259 = vst [vmem:[%s230] sm:$0x3] %v258
        %s260 = sld [smem:[#allocation2 + $0x80]]
        %v261 = vstv %s260
        %v262 = vmul.f32 %v231, %v261
        %s263 = sld [smem:[#allocation7 + $0x1]]
        %v264 = vstv %s263
        %v265 = vadd.f32 %v262, %v264
        %s266 = sld [smem:[#allocation2 + $0x81]]
        %v267 = vstv %s266
        %v268 = vmul.f32 %v234, %v267
        %v269 = vadd.f32 %v265, %v268
        %s270 = sld [smem:[#allocation2 + $0x82]]
        %v271 = vstv %s270
        %v272 = vmul.f32 %v237, %v271
        %v273 = vadd.f32 %v269, %v272
        %s274 = sld [smem:[#allocation2 + $0x83]]
        %v275 = vstv %s274
        %v276 = vmul.f32 %v240, %v275
        %v277 = vadd.f32 %v273, %v276
        %s278 = scalar_lea.vmem %s230, %s232 [#allocation9]
        %279 = vst [vmem:[%s278] sm:$0x3] %v277
        %s280 = sld [smem:[#allocation2 + $0x100]]
        %v281 = vstv %s280
        %v282 = vmul.f32 %v231, %v281
        %s283 = sld [smem:[#allocation7 + $0x2]]
        %v284 = vstv %s283
        %v285 = vadd.f32 %v282, %v284
        %s286 = sld [smem:[#allocation2 + $0x101]]
        %v287 = vstv %s286
        %v288 = vmul.f32 %v234, %v287
        %v289 = vadd.f32 %v285, %v288
        %s290 = sld [smem:[#allocation2 + $0x102]]
        %v291 = vstv %s290
        %v292 = vmul.f32 %v237, %v291
        %v293 = vadd.f32 %v289, %v292
        %s294 = sld [smem:[#allocation2 + $0x103]]
        %v295 = vstv %s294
        %v296 = vmul.f32 %v240, %v295
        %v297 = vadd.f32 %v293, %v296
        %s298 = scalar_lea.vmem %s230, %s235 [#allocation9]
        %299 = vst [vmem:[%s298] sm:$0x3] %v297
        %s300 = sand.u32 %s114, 1
        %s301 = scalar_lea.sflag [#allocation4], %s300
        %s302 = sand.u32 %s114, 1
        %s303 = smul.addr %s302, 6
        %s304 = scalar_lea.vmem [#allocation9], %s303
        // Predicated region
        $region45: #{tpu_custom_call.1} parent=31 // pred_check
          %p305 = pneg %p124
        $region46: #{tpu_custom_call.1} parent=31 // pred_check_branch
          %307 = sbr.rel (%p305) target = $region48
        $region47: #{tpu_custom_call.1} parent=31 // pred_region
          %s309 = ssub.s32 96, 96
          %310 = vsyncadd %s301, %s309
          %s311 = smul.addr %s26, 3
          %s312 = sadd.s32 %s27, %s311
          %s313 = smul.addr %s312, 32
          %s314 = scalar_lea.hbm %s3, %s313
          %s315 = sshll.u32 %s304, 4
          %s316 = int_to_ptr.vmem [resolvable:$true] %s315
          %321 = dma.vmem_to_hbm [thread:$0]  %s316, 96, %s314, %s301, 32, 32, 2
        $region48: #{tpu_custom_call.1} parent=31 // pred_fallthru
          _
      $region32: #{tpu_custom_call.1} parent=5 // pred_fallthru
        _
      %p322 = scmp.le.s32.totalorder 2, %s17
      // Predicated region
      $region49: #{tpu_custom_call.1} parent=5 // pred_check
        %p323 = pneg %p322
      $region50: #{tpu_custom_call.1} parent=5 // pred_check_branch
        %325 = sbr.rel (%p323) target = $region52
      $region51: #{tpu_custom_call.1} parent=5 // pred_region
        %s326 = ssub.s32 %s17, 2
        // Predicated region
        $region53: #{tpu_custom_call.1} parent=51 // pred_check
          %p327 = pneg %p130
        $region54: #{tpu_custom_call.1} parent=51 // pred_check_branch
          %329 = sbr.rel (%p327) target = $region56
        $region55: #{tpu_custom_call.1} parent=51 // pred_region
          %s330 = sand.u32 %s115, 1
          %s331 = scalar_lea.sflag [#allocation4], %s330
          %s332 = sand.u32 %s115, 1
          %s333 = smul.addr %s332, 6
          %s334 = scalar_lea.vmem [#allocation9], %s333
          %335 = dma.done %s331, 96
        $region56: #{tpu_custom_call.1} parent=51 // pred_fallthru
          _
      $region52: #{tpu_custom_call.1} parent=5 // pred_fallthru
        _
    $region6: #{tpu_custom_call.1} parent=1 // loop_footer
      %s21 = sadd.s32 1, %s17
    $region7: #{tpu_custom_call.1} parent=1 // loop_footer_branch
      %16 = sbr.rel target = $region3
    $region8: #{tpu_custom_call.1} parent=1 // loop_exit
      _
    %336 = vsyncpa [#allocation3], 1
    %s337 = scalar_lea.sflag [#allocation3], 1
    %338 = vsyncpa %s337, 1
    %339 = vsyncpa [#allocation4], 1
    %s340 = scalar_lea.sflag [#allocation4], 1
    %341 = vsyncpa %s340, 1
    %342 = vsyncpa [#allocation5], 1
    %s343 = scalar_lea.sflag [#allocation5], 1
    %344 = vsyncpa %s343, 1
    %345 = vsyncpa [#allocation6], 1
    %s346 = scalar_lea.sflag [#allocation6], 1
    %347 = vsyncpa %s346, 1

</llo_original>
